<compile_context>
chip_gen: v7x
topology: tpu7x:2x2x1
jax: 0.10.0
libtpu: 0.0.40
codegen_flags: <defaults>
</compile_context>

<pallas_src>
import functools
import math

import jax
import jax.numpy as jnp
from jax.experimental import pallas as pl
from jax.experimental.pallas import tpu as pltpu


def _round_up(v, m):
    return (v + m - 1) // m * m


def _slab_layout(din, hidden):
    """Row/lane layout of the packed parameter slab (all offsets 8-aligned)."""
    r_lw1 = _round_up(din, 8)
    r_w2 = r_lw1 + _round_up(din, 8)
    r_lw2 = r_w2 + _round_up(hidden, 8)
    r_b1 = r_lw2 + _round_up(hidden, 8)
    r_b2 = r_b1 + 8
    n_rows = _round_up(r_b2 + 1, 8)
    n_lanes = _round_up(max(hidden, din), 128)
    return dict(r_lw1=r_lw1, r_w2=r_w2, r_lw2=r_lw2, r_b1=r_b1, r_b2=r_b2,
                n_rows=n_rows, n_lanes=n_lanes)


def pack_gresblock_params(w1, lw1, b1, w2, lw2, b2):
    """Pack all six GResBlock parameters into one lane-dense f32 slab.

    Call ONCE at parameter-prep time (outside the per-step jit) so the jitted
    forward path contains only the pallas_call (+ optional adj cast).
    """
    din, hidden = w1.shape
    lay = _slab_layout(din, hidden)
    slab = jnp.zeros((lay["n_rows"], lay["n_lanes"]), jnp.float32)
    slab = slab.at[0:din, 0:hidden].set(w1.astype(jnp.float32))
    slab = slab.at[lay["r_lw1"]:lay["r_lw1"] + din, 0:hidden].set(
        lw1.astype(jnp.float32))
    slab = slab.at[lay["r_w2"]:lay["r_w2"] + hidden, 0:din].set(
        w2.astype(jnp.float32))
    slab = slab.at[lay["r_lw2"]:lay["r_lw2"] + hidden, 0:din].set(
        lw2.astype(jnp.float32))
    slab = slab.at[lay["r_b1"], 0:hidden].set(b1.astype(jnp.float32))
    slab = slab.at[lay["r_b2"], 0:din].set(b2.astype(jnp.float32))
    return slab


def _gresblock_kernel(x_ref, adj_ref, p_ref, o_ref, *,
                      din, hidden, r_lw1, r_w2, r_lw2, r_b1, r_b2, use_relu):
    x = x_ref[...]          # [N, Din]  f32
    adj = adj_ref[...]      # [N, N]    f32 or bf16 (MXU input dtype)

    # Static views into the parameter slab: every sublane start is 8-aligned
    # and every lane slice starts at lane 0 -> no realign copies.
    w1 = p_ref[0:din, 0:hidden]                      # [Din, H]
    lw1 = p_ref[r_lw1:r_lw1 + din, 0:hidden]         # [Din, H]
    w2 = p_ref[r_w2:r_w2 + hidden, 0:din]            # [H, Din]
    lw2 = p_ref[r_lw2:r_lw2 + hidden, 0:din]         # [H, Din]
    b1 = p_ref[r_b1:r_b1 + 1, 0:hidden]              # [1, H]
    b2 = p_ref[r_b2:r_b2 + 1, 0:din]                 # [1, Din]

    # ---- conv1 (restructured): contract adj against x first, so the only
    # O(N^2) matmul is N*N*Din (not N*N*H); then project Din -> H. ----------
    ax = jnp.dot(adj, x.astype(adj.dtype),
                 preferred_element_type=jnp.float32)            # [N, Din]
    h = (jnp.dot(ax, w1, preferred_element_type=jnp.float32)
         + jnp.dot(x, lw1, preferred_element_type=jnp.float32)
         + b1)                                                  # [N, H]
    if use_relu:
        h = jnp.maximum(h, 0.0)

    # ---- conv2: project H -> Din first, then contract adj against the
    # narrow [N, Din] support (keeps the O(N^2) matmul at Din width). -------
    support2 = jnp.dot(h, w2, preferred_element_type=jnp.float32)   # [N, Din]
    loop2 = jnp.dot(h, lw2, preferred_element_type=jnp.float32)     # [N, Din]
    y = (jnp.dot(adj, support2.astype(adj.dtype),
                 preferred_element_type=jnp.float32)
         + loop2 + b2)
    if use_relu:
        y = jnp.maximum(y, 0.0)

    # Residual + 0.5 scale, in f32 (v5e has no bf16 VPU).
    # Note: [N, Din] with Din=12 is a lane-sparse store; kept as-is to match
    # the module's output shape (pad Din at the wrapper boundary only if the
    # surrounding graph tolerates it).
    o_ref[...] = (x + y) * 0.5


def gresblock_pallas(x, adj, param_slab, *, hidden, use_relu=False,
                     adj_bf16=True):
    """GResBlock forward.

    x:          [N, Din] float  (vertex features)
    adj:        [N, N]   float  (dense adjacency, row-normalized)
    param_slab: packed parameters from pack_gresblock_params()
    """
    n, din = x.shape
    lay = _slab_layout(din, hidden)

    x = x.astype(jnp.float32)
    # bf16 adjacency halves the dominant HBM stream at real mesh sizes and is
    # the native MXU input dtype; accumulation stays f32 inside the kernel.
    adj = adj.astype(jnp.bfloat16 if adj_bf16 else jnp.float32)

    kernel = functools.partial(
        _gresblock_kernel,
        din=din, hidden=hidden,
        r_lw1=lay["r_lw1"], r_w2=lay["r_w2"], r_lw2=lay["r_lw2"],
        r_b1=lay["r_b1"], r_b2=lay["r_b2"],
        use_relu=use_relu)

    vmem = pl.BlockSpec(memory_space=pltpu.MemorySpace.VMEM)
    return pl.pallas_call(
        kernel,
        out_shape=jax.ShapeDtypeStruct((n, din), jnp.float32),
        in_specs=[vmem, vmem, vmem],
        out_specs=vmem,
    )(x, adj, param_slab)


def _xavier_uniform(key, shape):
    fan_in, fan_out = shape
    a = math.sqrt(6.0 / (fan_in + fan_out))
    return jax.random.uniform(key, shape, jnp.float32, minval=-a, maxval=a)


def _reference(x, adj, w1, lw1, b1, w2, lw2, b2, use_relu):
    h = adj @ (x @ w1) + x @ lw1 + b1
    if use_relu:
        h = jnp.maximum(h, 0.0)
    y = adj @ (h @ w2) + h @ lw2 + b2
    if use_relu:
        y = jnp.maximum(y, 0.0)
    return (x + y) * 0.5


if __name__ == "__main__":
    key = jax.random.PRNGKey(0)
    N = 16          # number of graph vertices
    IN_DIM = 12     # in_features of GResBlock
    HIDDEN = 32     # hidden_dim

    keys = jax.random.split(key, 8)
    x = jax.random.normal(keys[0], (N, IN_DIM), jnp.float32)
    # deterministic dense adjacency (row-normalized random graph)
    adj_raw = (jax.random.uniform(keys[1], (N, N)) > 0.7).astype(jnp.float32)
    adj = adj_raw / jnp.maximum(adj_raw.sum(axis=1, keepdims=True), 1.0)

    # conv1: in_dim -> hidden ; conv2: hidden -> in_dim  (xavier_uniform, bias=0)
    w1 = _xavier_uniform(keys[2], (IN_DIM, HIDDEN))
    lw1 = _xavier_uniform(keys[3], (IN_DIM, HIDDEN))
    b1 = jnp.zeros((HIDDEN,), jnp.float32)
    w2 = _xavier_uniform(keys[4], (HIDDEN, IN_DIM))
    lw2 = _xavier_uniform(keys[5], (HIDDEN, IN_DIM))
    b2 = jnp.zeros((IN_DIM,), jnp.float32)

    # GResBlock default has activation=None (no relu); exercise that path.
    USE_RELU = False

    # Pack parameters once, outside the jitted per-step path.
    slab = pack_gresblock_params(w1, lw1, b1, w2, lw2, b2)
    ref = _reference(x, adj, w1, lw1, b1, w2, lw2, b2, USE_RELU)

    # 1) exact-f32 path: bitwise-faithful to the module semantics.
    run_f32 = jax.jit(functools.partial(
        gresblock_pallas, hidden=HIDDEN, use_relu=USE_RELU, adj_bf16=False))
    out = jax.block_until_ready(run_f32(x, adj, slab))
    assert out.shape == (N, IN_DIM)
    assert jnp.allclose(out, ref, atol=1e-5, rtol=1e-5)

    # 2) bf16-adjacency path (production default: halves the dominant HBM
    #    stream); row-normalized adjacency loses negligible precision.
    run_bf16 = jax.jit(functools.partial(
        gresblock_pallas, hidden=HIDDEN, use_relu=USE_RELU, adj_bf16=True))
    out_bf16 = jax.block_until_ready(run_bf16(x, adj, slab))
    assert out_bf16.shape == (N, IN_DIM)
    assert jnp.allclose(out_bf16, ref, atol=3e-2, rtol=3e-2)

    print("KERNEL_OK")
</pallas_src>

<mosaic_0001>
module attributes {stable_mosaic.version = 11 : i64} {
  func.func @_gresblock_kernel(%arg0: memref<16x12xf32, #tpu.memory_space<vmem>>, %arg1: memref<16x16xf32, #tpu.memory_space<vmem>>, %arg2: memref<112x128xf32, #tpu.memory_space<vmem>>, %arg3: memref<16x12xf32, #tpu.memory_space<vmem>>) attributes {dimension_semantics = [], scalar_prefetch = 0 : i64, scratch_operands = 0 : i64, tpu.core_type = #tpu.core_type<tc>} {
    %c0 = arith.constant 0 : index
    %c0_0 = arith.constant 0 : index
    %0 = vector.load %arg0[%c0, %c0_0] : memref<16x12xf32, #tpu.memory_space<vmem>>, vector<16x12xf32>
    %c0_1 = arith.constant 0 : index
    %c0_2 = arith.constant 0 : index
    %1 = vector.load %arg1[%c0_1, %c0_2] : memref<16x16xf32, #tpu.memory_space<vmem>>, vector<16x16xf32>
    %c0_3 = arith.constant 0 : index
    %c0_4 = arith.constant 0 : index
    %2 = vector.load %arg2[%c0_3, %c0_4] : memref<112x128xf32, #tpu.memory_space<vmem>>, vector<12x32xf32>
    %c16 = arith.constant 16 : index
    %c0_5 = arith.constant 0 : index
    %3 = vector.load %arg2[%c16, %c0_5] : memref<112x128xf32, #tpu.memory_space<vmem>>, vector<12x32xf32>
    %c32 = arith.constant 32 : index
    %c0_6 = arith.constant 0 : index
    %4 = vector.load %arg2[%c32, %c0_6] : memref<112x128xf32, #tpu.memory_space<vmem>>, vector<32x12xf32>
    %c64 = arith.constant 64 : index
    %c0_7 = arith.constant 0 : index
    %5 = vector.load %arg2[%c64, %c0_7] : memref<112x128xf32, #tpu.memory_space<vmem>>, vector<32x12xf32>
    %c96 = arith.constant 96 : index
    %c0_8 = arith.constant 0 : index
    %6 = vector.load %arg2[%c96, %c0_8] : memref<112x128xf32, #tpu.memory_space<vmem>>, vector<1x32xf32>
    %c104 = arith.constant 104 : index
    %c0_9 = arith.constant 0 : index
    %7 = vector.load %arg2[%c104, %c0_9] : memref<112x128xf32, #tpu.memory_space<vmem>>, vector<1x12xf32>
    %cst = arith.constant dense<0.000000e+00> : vector<16x12xf32>
    %8 = tpu.matmul %1, %0, %cst {dimension_numbers = #tpu.dot_dimension_numbers<[1], [0], [0], [1], [0, 0, 1, 1], [], []>} : vector<16x16xf32>, vector<16x12xf32>, vector<16x12xf32> -> vector<16x12xf32>
    %cst_10 = arith.constant dense<0.000000e+00> : vector<16x32xf32>
    %9 = tpu.matmul %8, %2, %cst_10 {dimension_numbers = #tpu.dot_dimension_numbers<[1], [0], [0], [1], [0, 0, 1, 1], [], []>} : vector<16x12xf32>, vector<12x32xf32>, vector<16x32xf32> -> vector<16x32xf32>
    %cst_11 = arith.constant dense<0.000000e+00> : vector<16x32xf32>
    %10 = tpu.matmul %0, %3, %cst_11 {dimension_numbers = #tpu.dot_dimension_numbers<[1], [0], [0], [1], [0, 0, 1, 1], [], []>} : vector<16x12xf32>, vector<12x32xf32>, vector<16x32xf32> -> vector<16x32xf32>
    %11 = arith.addf %9, %10 : vector<16x32xf32>
    %12 = vector.broadcast %6 : vector<1x32xf32> to vector<16x32xf32>
    %13 = arith.addf %11, %12 : vector<16x32xf32>
    %cst_12 = arith.constant dense<0.000000e+00> : vector<16x12xf32>
    %14 = tpu.matmul %13, %4, %cst_12 {dimension_numbers = #tpu.dot_dimension_numbers<[1], [0], [0], [1], [0, 0, 1, 1], [], []>} : vector<16x32xf32>, vector<32x12xf32>, vector<16x12xf32> -> vector<16x12xf32>
    %cst_13 = arith.constant dense<0.000000e+00> : vector<16x12xf32>
    %15 = tpu.matmul %13, %5, %cst_13 {dimension_numbers = #tpu.dot_dimension_numbers<[1], [0], [0], [1], [0, 0, 1, 1], [], []>} : vector<16x32xf32>, vector<32x12xf32>, vector<16x12xf32> -> vector<16x12xf32>
    %cst_14 = arith.constant dense<0.000000e+00> : vector<16x12xf32>
    %16 = tpu.matmul %1, %14, %cst_14 {dimension_numbers = #tpu.dot_dimension_numbers<[1], [0], [0], [1], [0, 0, 1, 1], [], []>} : vector<16x16xf32>, vector<16x12xf32>, vector<16x12xf32> -> vector<16x12xf32>
    %17 = arith.addf %16, %15 : vector<16x12xf32>
    %18 = vector.broadcast %7 : vector<1x12xf32> to vector<16x12xf32>
    %19 = arith.addf %17, %18 : vector<16x12xf32>
    %20 = arith.addf %0, %19 : vector<16x12xf32>
    %cst_15 = arith.constant 5.000000e-01 : f32
    %21 = vector.broadcast %cst_15 : f32 to vector<16x12xf32>
    %22 = arith.mulf %20, %21 : vector<16x12xf32>
    %c0_16 = arith.constant 0 : index
    %c0_17 = arith.constant 0 : index
    %23 = vector.load %arg3[%c0_16, %c0_17] : memref<16x12xf32, #tpu.memory_space<vmem>>, vector<16x12xf32>
    tpu.vector_store %arg3[%c0_16, %c0_17], %22 {strides = array<i32>} : memref<16x12xf32, #tpu.memory_space<vmem>>, vector<16x12xf32>,
    return
  }
}

</mosaic_0001>

<llo_original>
// kernel: gresblock_pallas.1
$region0: #{gresblock_pallas.1}
  #allocation0 [shape = 'u32[]', space=smem, size = 0x4, offset = 0x4, fixed_abs, tag = 'smem constant byte address 0x4 - core index']
  #allocation1 [shape = 'u32[144,128]{1,0:T(1,128)}', space=vmem, size = 0x12000, scoped, tag = 'internal scratch']
  %s0 = inlined_call_operand.hbm [shape: f32[16,12], index: 0, kind: input, shape index: {}]
  %s1 = inlined_call_operand.hbm [shape: f32[16,16], index: 1, kind: input, shape index: {}]
  %s2 = inlined_call_operand.hbm [shape: f32[112,128], index: 2, kind: input, shape index: {}]
  %s3 = inlined_call_operand.hbm [shape: f32[16,12], index: 3, kind: output, shape index: {}]
  %s4 = sld [smem:[#allocation0]]
  $region34: #{gresblock_pallas.1} parent=0
    _
  %s6 = ssub.s32 1, %s4
  %s7 = scalar_select 0, %s6, %s4
  $region1: #{gresblock_pallas.1} parent=0
    #allocation2 [shape = 'u8[8192]{0}', space=vmem, size = 0x2000, scoped, tag = 'input window, operand 0, single buffered']
    #allocation3 [shape = 's32[1]{0}', space=sflag, size = 0x4, scoped, tag = 'scoped memory for gresblock_pallas.1']
    #allocation4 [shape = 's32[1]{0}', space=sflag, size = 0x4, scoped, tag = 'scoped memory for gresblock_pallas.1']
    #allocation5 [shape = 'u8[8192]{0}', space=vmem, size = 0x2000, scoped, tag = 'input window, operand 1, single buffered']
    #allocation6 [shape = 's32[1]{0}', space=sflag, size = 0x4, scoped, tag = 'scoped memory for gresblock_pallas.1']
    #allocation7 [shape = 'u8[57344]{0}', space=vmem, size = 0xe000, scoped, tag = 'input window, operand 2, single buffered']
    #allocation8 [shape = 'u8[8192]{0}', space=vmem, size = 0x2000, scoped, tag = 'output window, operand 0, single buffered']
    %8 = vsyncpa [#allocation3], 0
    %9 = vsyncpa [#allocation6], 0
    %10 = vsyncpa [#allocation4], 0
    // Predicated region
    $region2: #{gresblock_pallas.1} parent=1 // pred_check
      _
    $region3: #{gresblock_pallas.1} parent=1 // pred_check_branch
      %12 = sbr.rel (0) target = $region5
    $region4: #{gresblock_pallas.1} parent=1 // pred_region
      %s14 = ssub.s32 256, 256
      %15 = vsyncadd [#allocation3], %s14
      %s16 = sshll.u32 [#allocation2], 4
      %s17 = int_to_ptr.vmem [resolvable:$true] %s16
      %22 = dma.hbm_to_vmem [thread:$0]  %s0, 256, %s17, [#allocation3], 128, 128, 8
    $region5: #{gresblock_pallas.1} parent=1 // pred_fallthru
      _
    // Predicated region
    $region6: #{gresblock_pallas.1} parent=1 // pred_check
      _
    $region7: #{gresblock_pallas.1} parent=1 // pred_check_branch
      %24 = sbr.rel (0) target = $region9
    $region8: #{gresblock_pallas.1} parent=1 // pred_region
      %s26 = ssub.s32 256, 256
      %27 = vsyncadd [#allocation6], %s26
      %s28 = sshll.u32 [#allocation5], 4
      %s29 = int_to_ptr.vmem [resolvable:$true] %s28
      %34 = dma.hbm_to_vmem [thread:$0]  %s1, 256, %s29, [#allocation6], 128, 128, 8
    $region9: #{gresblock_pallas.1} parent=1 // pred_fallthru
      _
    // Predicated region
    $region10: #{gresblock_pallas.1} parent=1 // pred_check
      _
    $region11: #{gresblock_pallas.1} parent=1 // pred_check_branch
      %36 = sbr.rel (0) target = $region13
    $region12: #{gresblock_pallas.1} parent=1 // pred_region
      %s38 = ssub.s32 1792, 1792
      %39 = vsyncadd [#allocation6], %s38
      %s40 = sshll.u32 [#allocation7], 4
      %s41 = int_to_ptr.vmem [resolvable:$true] %s40
      %46 = dma.hbm_to_vmem [thread:$0]  %s2, 1792, %s41, [#allocation6], 128, 128, 8
    $region13: #{gresblock_pallas.1} parent=1 // pred_fallthru
      _
    // Predicated region
    $region14: #{gresblock_pallas.1} parent=1 // pred_check
      _
    $region15: #{gresblock_pallas.1} parent=1 // pred_check_branch
      %48 = sbr.rel (0) target = $region17
    $region16: #{gresblock_pallas.1} parent=1 // pred_region
      %49 = dma.done [#allocation3], 256
    $region17: #{gresblock_pallas.1} parent=1 // pred_fallthru
      _
    // Predicated region
    $region18: #{gresblock_pallas.1} parent=1 // pred_check
      _
    $region19: #{gresblock_pallas.1} parent=1 // pred_check_branch
      %51 = sbr.rel (0) target = $region21
    $region20: #{gresblock_pallas.1} parent=1 // pred_region
      %52 = dma.done [#allocation6], 256
    $region21: #{gresblock_pallas.1} parent=1 // pred_fallthru
      _
    // Predicated region
    $region22: #{gresblock_pallas.1} parent=1 // pred_check
      _
    $region23: #{gresblock_pallas.1} parent=1 // pred_check_branch
      %54 = sbr.rel (0) target = $region25
    $region24: #{gresblock_pallas.1} parent=1 // pred_region
      %55 = dma.done [#allocation6], 1792
    $region25: #{gresblock_pallas.1} parent=1 // pred_fallthru
      _
    %v56 = vld [vmem:[#allocation2] sm:$0xff]
    %v57 = vld [vmem:[#allocation2 + $0x8] sm:$0xff]
    %v58 = vld [vmem:[#allocation5] sm:$0xff]
    %v59 = vld [vmem:[#allocation5 + $0x8] sm:$0xff]
    %v60 = vld [vmem:[#allocation7] sm:$0xff]
    %v61 = vld [vmem:[#allocation7 + $0x8] sm:$0xf]
    %v62 = vld [vmem:[#allocation7 + $0x10] sm:$0xff]
    %v63 = vld [vmem:[#allocation7 + $0x18] sm:$0xf]
    %v64 = vld [vmem:[#allocation7 + $0x20] sm:$0xff]
    %v65 = vld [vmem:[#allocation7 + $0x28] sm:$0xff]
    %v66 = vld [vmem:[#allocation7 + $0x30] sm:$0xff]
    %v67 = vld [vmem:[#allocation7 + $0x38] sm:$0xff]
    %v68 = vld [vmem:[#allocation7 + $0x40] sm:$0xff]
    %v69 = vld [vmem:[#allocation7 + $0x48] sm:$0xff]
    %v70 = vld [vmem:[#allocation7 + $0x50] sm:$0xff]
    %v71 = vld [vmem:[#allocation7 + $0x58] sm:$0xff]
    %v72 = vld [vmem:[#allocation7 + $0x60] sm:$0x1]
    %v73 = vld [vmem:[#allocation7 + $0x68] sm:$0x1]
    %vm74 = vcmask 130048
    %v76 = vsel %vm74, %v58, 0
    %v79 = vsel %vm74, %v59, 0
    %81 = vmatprep.subr.mxu0 0.0
    %82 = vmatpush1.msra.mxu0 %v56
    %83 = vmatprep.subr.mxu0 0.0
    %84 = vmatpush1.msra.mxu0 %v57
    %85 = vmatprep.subr.mxu0 0.0
    %86 = vmatpush1.msra.mxu0 0.0
    %87 = vmatprep.subr.mxu0 0.0
    %88 = vmatpush1.msra.mxu0 0.0
    %89 = vmatprep.subr.mxu0 0.0
    %90 = vmatpush1.msra.mxu0 0.0
    %91 = vmatprep.subr.mxu0 0.0
    %92 = vmatpush1.msra.mxu0 0.0
    %93 = vmatprep.subr.mxu0 0.0
    %94 = vmatpush1.msra.mxu0 0.0
    %95 = vmatprep.subr.mxu0 0.0
    %96 = vmatpush1.msra.mxu0 0.0
    %97 = vmatprep.subr.mxu0 0.0
    %98 = vmatpush1.msra.mxu0 0.0
    %99 = vmatprep.subr.mxu0 0.0
    %100 = vmatpush1.msra.mxu0 0.0
    %101 = vmatprep.subr.mxu0 0.0
    %102 = vmatpush1.msra.mxu0 0.0
    %103 = vmatprep.subr.mxu0 0.0
    %104 = vmatpush1.msra.mxu0 0.0
    %105 = vmatprep.subr.mxu0 0.0
    %106 = vmatpush1.msra.mxu0 0.0
    %107 = vmatprep.subr.mxu0 0.0
    %108 = vmatpush1.msra.mxu0 0.0
    %109 = vmatprep.subr.mxu0 0.0
    %110 = vmatpush1.msra.mxu0 0.0
    %111 = vmatprep.subr.mxu0 0.0
    %112 = vmatpush1.msra.mxu0 0.0
    %113 = vmatprep.subr.mxu0 0.0
    %114 = vmatpush1.msra.mxu0 0.0
    %115 = vmatprep.subr.mxu0 0.0
    %116 = vmatpush1.msra.mxu0 0.0
    %117 = vmatprep.subr.mxu0 0.0
    %118 = vmatpush1.msra.mxu0 0.0
    %119 = vmatprep.subr.mxu0 0.0
    %120 = vmatpush1.msra.mxu0 0.0
    %121 = vmatprep.subr.mxu0 0.0
    %122 = vmatpush1.msra.mxu0 0.0
    %123 = vmatprep.subr.mxu0 0.0
    %124 = vmatpush1.msra.mxu0 0.0
    %125 = vmatprep.subr.mxu0 0.0
    %126 = vmatpush1.msra.mxu0 0.0
    %127 = vmatprep.subr.mxu0 0.0
    %128 = vmatpush1.msra.mxu0 0.0
    %129 = vmatprep.subr.mxu0 0.0
    %130 = vmatpush1.msra.mxu0 0.0
    %131 = vmatprep.subr.mxu0 0.0
    %132 = vmatpush1.msra.mxu0 0.0
    %133 = vmatprep.subr.mxu0 0.0
    %134 = vmatpush1.msra.mxu0 0.0
    %135 = vmatprep.subr.mxu0 0.0
    %136 = vmatpush1.msra.mxu0 0.0
    %137 = vmatprep.subr.mxu0 0.0
    %138 = vmatpush1.msra.mxu0 0.0
    %139 = vmatprep.subr.mxu0 0.0
    %140 = vmatpush1.msra.mxu0 0.0
    %141 = vmatprep.subr.mxu0 0.0
    %142 = vmatpush1.msra.mxu0 0.0
    %143 = vmatprep.subr.mxu0 0.0
    %144 = vmatpush1.msra.mxu0 0.0
    %145 = vmatprep.mubr.f32.mxu0 0.0
    %146 = vmatmul.mubr.f32.gmra.mrb[0].mxu0 %v76
    %v147 = vpop.f32.mrb[0].mxu0
    %v148 = vadd.f32 0.0, %v147
    %v149 = vpop.f32.mrb[0].mxu0
    %150 = vmatprep.mubr.f32.mxu0 0.0
    %151 = vmatmul.mubr.f32.gmra.mrb[0].mxu0 %v79
    %v152 = vpop.f32.mrb[0].mxu0
    %v153 = vadd.f32 0.0, %v152
    %v154 = vpop.f32.mrb[0].mxu0
    %155 = vdwg.mxu0
    %vm156 = vcmask 97280
    %v158 = vsel %vm156, %v56, 0
    %v161 = vsel %vm156, %v57, 0
    %vm163 = vcmask 1043456
    %v165 = vsel %vm163, %v63, 0
    %167 = vmatprep.subr.mxu0 0.0
    %168 = vmatpush1.msra.mxu0 %v62
    %169 = vmatprep.subr.mxu0 0.0
    %170 = vmatpush1.msra.mxu0 %v165
    %171 = vmatprep.subr.mxu0 0.0
    %172 = vmatpush1.msra.mxu0 0.0
    %173 = vmatprep.subr.mxu0 0.0
    %174 = vmatpush1.msra.mxu0 0.0
    %175 = vmatprep.subr.mxu0 0.0
    %176 = vmatpush1.msra.mxu0 0.0
    %177 = vmatprep.subr.mxu0 0.0
    %178 = vmatpush1.msra.mxu0 0.0
    %179 = vmatprep.subr.mxu0 0.0
    %180 = vmatpush1.msra.mxu0 0.0
    %181 = vmatprep.subr.mxu0 0.0
    %182 = vmatpush1.msra.mxu0 0.0
    %183 = vmatprep.subr.mxu0 0.0
    %184 = vmatpush1.msra.mxu0 0.0
    %185 = vmatprep.subr.mxu0 0.0
    %186 = vmatpush1.msra.mxu0 0.0
    %187 = vmatprep.subr.mxu0 0.0
    %188 = vmatpush1.msra.mxu0 0.0
    %189 = vmatprep.subr.mxu0 0.0
    %190 = vmatpush1.msra.mxu0 0.0
    %191 = vmatprep.subr.mxu0 0.0
    %192 = vmatpush1.msra.mxu0 0.0
    %193 = vmatprep.subr.mxu0 0.0
    %194 = vmatpush1.msra.mxu0 0.0
    %195 = vmatprep.subr.mxu0 0.0
    %196 = vmatpush1.msra.mxu0 0.0
    %197 = vmatprep.subr.mxu0 0.0
    %198 = vmatpush1.msra.mxu0 0.0
    %199 = vmatprep.subr.mxu0 0.0
    %200 = vmatpush1.msra.mxu0 0.0
    %201 = vmatprep.subr.mxu0 0.0
    %202 = vmatpush1.msra.mxu0 0.0
    %203 = vmatprep.subr.mxu0 0.0
    %204 = vmatpush1.msra.mxu0 0.0
    %205 = vmatprep.subr.mxu0 0.0
    %206 = vmatpush1.msra.mxu0 0.0
    %207 = vmatprep.subr.mxu0 0.0
    %208 = vmatpush1.msra.mxu0 0.0
    %209 = vmatprep.subr.mxu0 0.0
    %210 = vmatpush1.msra.mxu0 0.0
    %211 = vmatprep.subr.mxu0 0.0
    %212 = vmatpush1.msra.mxu0 0.0
    %213 = vmatprep.subr.mxu0 0.0
    %214 = vmatpush1.msra.mxu0 0.0
    %215 = vmatprep.subr.mxu0 0.0
    %216 = vmatpush1.msra.mxu0 0.0
    %217 = vmatprep.subr.mxu0 0.0
    %218 = vmatpush1.msra.mxu0 0.0
    %219 = vmatprep.subr.mxu0 0.0
    %220 = vmatpush1.msra.mxu0 0.0
    %221 = vmatprep.subr.mxu0 0.0
    %222 = vmatpush1.msra.mxu0 0.0
    %223 = vmatprep.subr.mxu0 0.0
    %224 = vmatpush1.msra.mxu0 0.0
    %225 = vmatprep.subr.mxu0 0.0
    %226 = vmatpush1.msra.mxu0 0.0
    %227 = vmatprep.subr.mxu0 0.0
    %228 = vmatpush1.msra.mxu0 0.0
    %229 = vmatprep.subr.mxu0 0.0
    %230 = vmatpush1.msra.mxu0 0.0
    %231 = vmatprep.mubr.f32.mxu0 0.0
    %232 = vmatmul.mubr.f32.gmra.mrb[0].mxu0 %v158
    %v233 = vpop.f32.mrb[0].mxu0
    %v234 = vadd.f32 0.0, %v233
    %v235 = vpop.f32.mrb[0].mxu0
    %236 = vmatprep.mubr.f32.mxu0 0.0
    %237 = vmatmul.mubr.f32.gmra.mrb[0].mxu0 %v161
    %v238 = vpop.f32.mrb[0].mxu0
    %v239 = vadd.f32 0.0, %v238
    %v240 = vpop.f32.mrb[0].mxu0
    %241 = vdwg.mxu0
    %v243 = vsel %vm156, %v148, 0
    %v246 = vsel %vm156, %v153, 0
    %v249 = vsel %vm163, %v61, 0
    %251 = vmatprep.subr.mxu0 0.0
    %252 = vmatpush1.msra.mxu0 %v60
    %253 = vmatprep.subr.mxu0 0.0
    %254 = vmatpush1.msra.mxu0 %v249
    %255 = vmatprep.subr.mxu0 0.0
    %256 = vmatpush1.msra.mxu0 0.0
    %257 = vmatprep.subr.mxu0 0.0
    %258 = vmatpush1.msra.mxu0 0.0
    %259 = vmatprep.subr.mxu0 0.0
    %260 = vmatpush1.msra.mxu0 0.0
    %261 = vmatprep.subr.mxu0 0.0
    %262 = vmatpush1.msra.mxu0 0.0
    %263 = vmatprep.subr.mxu0 0.0
    %264 = vmatpush1.msra.mxu0 0.0
    %265 = vmatprep.subr.mxu0 0.0
    %266 = vmatpush1.msra.mxu0 0.0
    %267 = vmatprep.subr.mxu0 0.0
    %268 = vmatpush1.msra.mxu0 0.0
    %269 = vmatprep.subr.mxu0 0.0
    %270 = vmatpush1.msra.mxu0 0.0
    %271 = vmatprep.subr.mxu0 0.0
    %272 = vmatpush1.msra.mxu0 0.0
    %273 = vmatprep.subr.mxu0 0.0
    %274 = vmatpush1.msra.mxu0 0.0
    %275 = vmatprep.subr.mxu0 0.0
    %276 = vmatpush1.msra.mxu0 0.0
    %277 = vmatprep.subr.mxu0 0.0
    %278 = vmatpush1.msra.mxu0 0.0
    %279 = vmatprep.subr.mxu0 0.0
    %280 = vmatpush1.msra.mxu0 0.0
    %281 = vmatprep.subr.mxu0 0.0
    %282 = vmatpush1.msra.mxu0 0.0
    %283 = vmatprep.subr.mxu0 0.0
    %284 = vmatpush1.msra.mxu0 0.0
    %285 = vmatprep.subr.mxu0 0.0
    %286 = vmatpush1.msra.mxu0 0.0
    %287 = vmatprep.subr.mxu0 0.0
    %288 = vmatpush1.msra.mxu0 0.0
    %289 = vmatprep.subr.mxu0 0.0
    %290 = vmatpush1.msra.mxu0 0.0
    %291 = vmatprep.subr.mxu0 0.0
    %292 = vmatpush1.msra.mxu0 0.0
    %293 = vmatprep.subr.mxu0 0.0
    %294 = vmatpush1.msra.mxu0 0.0
    %295 = vmatprep.subr.mxu0 0.0
    %296 = vmatpush1.msra.mxu0 0.0
    %297 = vmatprep.subr.mxu0 0.0
    %298 = vmatpush1.msra.mxu0 0.0
    %299 = vmatprep.subr.mxu0 0.0
    %300 = vmatpush1.msra.mxu0 0.0
    %301 = vmatprep.subr.mxu0 0.0
    %302 = vmatpush1.msra.mxu0 0.0
    %303 = vmatprep.subr.mxu0 0.0
    %304 = vmatpush1.msra.mxu0 0.0
    %305 = vmatprep.subr.mxu0 0.0
    %306 = vmatpush1.msra.mxu0 0.0
    %307 = vmatprep.subr.mxu0 0.0
    %308 = vmatpush1.msra.mxu0 0.0
    %309 = vmatprep.subr.mxu0 0.0
    %310 = vmatpush1.msra.mxu0 0.0
    %311 = vmatprep.subr.mxu0 0.0
    %312 = vmatpush1.msra.mxu0 0.0
    %313 = vmatprep.subr.mxu0 0.0
    %314 = vmatpush1.msra.mxu0 0.0
    %315 = vmatprep.mubr.f32.mxu0 0.0
    %316 = vmatmul.mubr.f32.gmra.mrb[0].mxu0 %v243
    %v317 = vpop.f32.mrb[0].mxu0
    %v318 = vadd.f32 %v234, %v317
    %v319 = vpop.f32.mrb[0].mxu0
    %320 = vmatprep.mubr.f32.mxu0 0.0
    %321 = vmatmul.mubr.f32.gmra.mrb[0].mxu0 %v246
    %v322 = vpop.f32.mrb[0].mxu0
    %v323 = vadd.f32 %v239, %v322
    %v324 = vpop.f32.mrb[0].mxu0
    %325 = vdwg.mxu0
    %v326 = vlaneseq
    %v327 = vshrl.u32 %v326, 7
    %v328 = vsub.s32 0, %v327
    %v329 = vrot.slane %v72, %v328
    %v330 = vadd.f32 %v318, %v329
    %v331 = vadd.f32 %v323, %v329
    %vm332 = vcmask 261120
    %v334 = vsel %vm332, %v330, 0
    %v337 = vsel %vm332, %v331, 0
    %339 = vmatprep.subr.mxu0 0.0
    %340 = vmatpush1.msra.mxu0 %v64
    %341 = vmatprep.subr.mxu0 0.0
    %342 = vmatpush1.msra.mxu0 %v65
    %343 = vmatprep.subr.mxu0 0.0
    %344 = vmatpush1.msra.mxu0 %v66
    %345 = vmatprep.subr.mxu0 0.0
    %346 = vmatpush1.msra.mxu0 %v67
    %347 = vmatprep.subr.mxu0 0.0
    %348 = vmatpush1.msra.mxu0 0.0
    %349 = vmatprep.subr.mxu0 0.0
    %350 = vmatpush1.msra.mxu0 0.0
    %351 = vmatprep.subr.mxu0 0.0
    %352 = vmatpush1.msra.mxu0 0.0
    %353 = vmatprep.subr.mxu0 0.0
    %354 = vmatpush1.msra.mxu0 0.0
    %355 = vmatprep.subr.mxu0 0.0
    %356 = vmatpush1.msra.mxu0 0.0
    %357 = vmatprep.subr.mxu0 0.0
    %358 = vmatpush1.msra.mxu0 0.0
    %359 = vmatprep.subr.mxu0 0.0
    %360 = vmatpush1.msra.mxu0 0.0
    %361 = vmatprep.subr.mxu0 0.0
    %362 = vmatpush1.msra.mxu0 0.0
    %363 = vmatprep.subr.mxu0 0.0
    %364 = vmatpush1.msra.mxu0 0.0
    %365 = vmatprep.subr.mxu0 0.0
    %366 = vmatpush1.msra.mxu0 0.0
    %367 = vmatprep.subr.mxu0 0.0
    %368 = vmatpush1.msra.mxu0 0.0
    %369 = vmatprep.subr.mxu0 0.0
    %370 = vmatpush1.msra.mxu0 0.0
    %371 = vmatprep.subr.mxu0 0.0
    %372 = vmatpush1.msra.mxu0 0.0
    %373 = vmatprep.subr.mxu0 0.0
    %374 = vmatpush1.msra.mxu0 0.0
    %375 = vmatprep.subr.mxu0 0.0
    %376 = vmatpush1.msra.mxu0 0.0
    %377 = vmatprep.subr.mxu0 0.0
    %378 = vmatpush1.msra.mxu0 0.0
    %379 = vmatprep.subr.mxu0 0.0
    %380 = vmatpush1.msra.mxu0 0.0
    %381 = vmatprep.subr.mxu0 0.0
    %382 = vmatpush1.msra.mxu0 0.0
    %383 = vmatprep.subr.mxu0 0.0
    %384 = vmatpush1.msra.mxu0 0.0
    %385 = vmatprep.subr.mxu0 0.0
    %386 = vmatpush1.msra.mxu0 0.0
    %387 = vmatprep.subr.mxu0 0.0
    %388 = vmatpush1.msra.mxu0 0.0
    %389 = vmatprep.subr.mxu0 0.0
    %390 = vmatpush1.msra.mxu0 0.0
    %391 = vmatprep.subr.mxu0 0.0
    %392 = vmatpush1.msra.mxu0 0.0
    %393 = vmatprep.subr.mxu0 0.0
    %394 = vmatpush1.msra.mxu0 0.0
    %395 = vmatprep.subr.mxu0 0.0
    %396 = vmatpush1.msra.mxu0 0.0
    %397 = vmatprep.subr.mxu0 0.0
    %398 = vmatpush1.msra.mxu0 0.0
    %399 = vmatprep.subr.mxu0 0.0
    %400 = vmatpush1.msra.mxu0 0.0
    %401 = vmatprep.subr.mxu0 0.0
    %402 = vmatpush1.msra.mxu0 0.0
    %403 = vmatprep.mubr.f32.mxu0 0.0
    %404 = vmatmul.mubr.f32.gmra.mrb[0].mxu0 %v334
    %v405 = vpop.f32.mrb[0].mxu0
    %v406 = vadd.f32 0.0, %v405
    %v407 = vpop.f32.mrb[0].mxu0
    %408 = vmatprep.mubr.f32.mxu0 0.0
    %409 = vmatmul.mubr.f32.gmra.mrb[0].mxu0 %v337
    %v410 = vpop.f32.mrb[0].mxu0
    %v411 = vadd.f32 0.0, %v410
    %v412 = vpop.f32.mrb[0].mxu0
    %413 = vdwg.mxu0
    %414 = vmatprep.subr.mxu0 0.0
    %415 = vmatpush1.msra.mxu0 %v68
    %416 = vmatprep.subr.mxu0 0.0
    %417 = vmatpush1.msra.mxu0 %v69
    %418 = vmatprep.subr.mxu0 0.0
    %419 = vmatpush1.msra.mxu0 %v70
    %420 = vmatprep.subr.mxu0 0.0
    %421 = vmatpush1.msra.mxu0 %v71
    %422 = vmatprep.subr.mxu0 0.0
    %423 = vmatpush1.msra.mxu0 0.0
    %424 = vmatprep.subr.mxu0 0.0
    %425 = vmatpush1.msra.mxu0 0.0
    %426 = vmatprep.subr.mxu0 0.0
    %427 = vmatpush1.msra.mxu0 0.0
    %428 = vmatprep.subr.mxu0 0.0
    %429 = vmatpush1.msra.mxu0 0.0
    %430 = vmatprep.subr.mxu0 0.0
    %431 = vmatpush1.msra.mxu0 0.0
    %432 = vmatprep.subr.mxu0 0.0
    %433 = vmatpush1.msra.mxu0 0.0
    %434 = vmatprep.subr.mxu0 0.0
    %435 = vmatpush1.msra.mxu0 0.0
    %436 = vmatprep.subr.mxu0 0.0
    %437 = vmatpush1.msra.mxu0 0.0
    %438 = vmatprep.subr.mxu0 0.0
    %439 = vmatpush1.msra.mxu0 0.0
    %440 = vmatprep.subr.mxu0 0.0
    %441 = vmatpush1.msra.mxu0 0.0
    %442 = vmatprep.subr.mxu0 0.0
    %443 = vmatpush1.msra.mxu0 0.0
    %444 = vmatprep.subr.mxu0 0.0
    %445 = vmatpush1.msra.mxu0 0.0
    %446 = vmatprep.subr.mxu0 0.0
    %447 = vmatpush1.msra.mxu0 0.0
    %448 = vmatprep.subr.mxu0 0.0
    %449 = vmatpush1.msra.mxu0 0.0
    %450 = vmatprep.subr.mxu0 0.0
    %451 = vmatpush1.msra.mxu0 0.0
    %452 = vmatprep.subr.mxu0 0.0
    %453 = vmatpush1.msra.mxu0 0.0
    %454 = vmatprep.subr.mxu0 0.0
    %455 = vmatpush1.msra.mxu0 0.0
    %456 = vmatprep.subr.mxu0 0.0
    %457 = vmatpush1.msra.mxu0 0.0
    %458 = vmatprep.subr.mxu0 0.0
    %459 = vmatpush1.msra.mxu0 0.0
    %460 = vmatprep.subr.mxu0 0.0
    %461 = vmatpush1.msra.mxu0 0.0
    %462 = vmatprep.subr.mxu0 0.0
    %463 = vmatpush1.msra.mxu0 0.0
    %464 = vmatprep.subr.mxu0 0.0
    %465 = vmatpush1.msra.mxu0 0.0
    %466 = vmatprep.subr.mxu0 0.0
    %467 = vmatpush1.msra.mxu0 0.0
    %468 = vmatprep.subr.mxu0 0.0
    %469 = vmatpush1.msra.mxu0 0.0
    %470 = vmatprep.subr.mxu0 0.0
    %471 = vmatpush1.msra.mxu0 0.0
    %472 = vmatprep.subr.mxu0 0.0
    %473 = vmatpush1.msra.mxu0 0.0
    %474 = vmatprep.subr.mxu0 0.0
    %475 = vmatpush1.msra.mxu0 0.0
    %476 = vmatprep.subr.mxu0 0.0
    %477 = vmatpush1.msra.mxu0 0.0
    %478 = vmatprep.mubr.f32.mxu0 0.0
    %479 = vmatmul.mubr.f32.gmra.mrb[0].mxu0 %v334
    %v480 = vpop.f32.mrb[0].mxu0
    %v481 = vadd.f32 0.0, %v480
    %v482 = vpop.f32.mrb[0].mxu0
    %483 = vmatprep.mubr.f32.mxu0 0.0
    %484 = vmatmul.mubr.f32.gmra.mrb[0].mxu0 %v337
    %v485 = vpop.f32.mrb[0].mxu0
    %v486 = vadd.f32 0.0, %v485
    %v487 = vpop.f32.mrb[0].mxu0
    %488 = vdwg.mxu0
    %489 = vmatprep.subr.mxu0 0.0
    %490 = vmatpush1.msra.mxu0 %v406
    %491 = vmatprep.subr.mxu0 0.0
    %492 = vmatpush1.msra.mxu0 %v411
    %493 = vmatprep.subr.mxu0 0.0
    %494 = vmatpush1.msra.mxu0 0.0
    %495 = vmatprep.subr.mxu0 0.0
    %496 = vmatpush1.msra.mxu0 0.0
    %497 = vmatprep.subr.mxu0 0.0
    %498 = vmatpush1.msra.mxu0 0.0
    %499 = vmatprep.subr.mxu0 0.0
    %500 = vmatpush1.msra.mxu0 0.0
    %501 = vmatprep.subr.mxu0 0.0
    %502 = vmatpush1.msra.mxu0 0.0
    %503 = vmatprep.subr.mxu0 0.0
    %504 = vmatpush1.msra.mxu0 0.0
    %505 = vmatprep.subr.mxu0 0.0
    %506 = vmatpush1.msra.mxu0 0.0
    %507 = vmatprep.subr.mxu0 0.0
    %508 = vmatpush1.msra.mxu0 0.0
    %509 = vmatprep.subr.mxu0 0.0
    %510 = vmatpush1.msra.mxu0 0.0
    %511 = vmatprep.subr.mxu0 0.0
    %512 = vmatpush1.msra.mxu0 0.0
    %513 = vmatprep.subr.mxu0 0.0
    %514 = vmatpush1.msra.mxu0 0.0
    %515 = vmatprep.subr.mxu0 0.0
    %516 = vmatpush1.msra.mxu0 0.0
    %517 = vmatprep.subr.mxu0 0.0
    %518 = vmatpush1.msra.mxu0 0.0
    %519 = vmatprep.subr.mxu0 0.0
    %520 = vmatpush1.msra.mxu0 0.0
    %521 = vmatprep.subr.mxu0 0.0
    %522 = vmatpush1.msra.mxu0 0.0
    %523 = vmatprep.subr.mxu0 0.0
    %524 = vmatpush1.msra.mxu0 0.0
    %525 = vmatprep.subr.mxu0 0.0
    %526 = vmatpush1.msra.mxu0 0.0
    %527 = vmatprep.subr.mxu0 0.0
    %528 = vmatpush1.msra.mxu0 0.0
    %529 = vmatprep.subr.mxu0 0.0
    %530 = vmatpush1.msra.mxu0 0.0
    %531 = vmatprep.subr.mxu0 0.0
    %532 = vmatpush1.msra.mxu0 0.0
    %533 = vmatprep.subr.mxu0 0.0
    %534 = vmatpush1.msra.mxu0 0.0
    %535 = vmatprep.subr.mxu0 0.0
    %536 = vmatpush1.msra.mxu0 0.0
    %537 = vmatprep.subr.mxu0 0.0
    %538 = vmatpush1.msra.mxu0 0.0
    %539 = vmatprep.subr.mxu0 0.0
    %540 = vmatpush1.msra.mxu0 0.0
    %541 = vmatprep.subr.mxu0 0.0
    %542 = vmatpush1.msra.mxu0 0.0
    %543 = vmatprep.subr.mxu0 0.0
    %544 = vmatpush1.msra.mxu0 0.0
    %545 = vmatprep.subr.mxu0 0.0
    %546 = vmatpush1.msra.mxu0 0.0
    %547 = vmatprep.subr.mxu0 0.0
    %548 = vmatpush1.msra.mxu0 0.0
    %549 = vmatprep.subr.mxu0 0.0
    %550 = vmatpush1.msra.mxu0 0.0
    %551 = vmatprep.subr.mxu0 0.0
    %552 = vmatpush1.msra.mxu0 0.0
    %553 = vmatprep.mubr.f32.mxu0 0.0
    %554 = vmatmul.mubr.f32.gmra.mrb[0].mxu0 %v76
    %v555 = vpop.f32.mrb[0].mxu0
    %v556 = vadd.f32 %v481, %v555
    %v557 = vpop.f32.mrb[0].mxu0
    %558 = vmatprep.mubr.f32.mxu0 0.0
    %559 = vmatmul.mubr.f32.gmra.mrb[0].mxu0 %v79
    %v560 = vpop.f32.mrb[0].mxu0
    %v561 = vadd.f32 %v486, %v560
    %v562 = vpop.f32.mrb[0].mxu0
    %563 = vdwg.mxu0
    %v564 = vlaneseq
    %v565 = vshrl.u32 %v564, 7
    %v566 = vsub.s32 0, %v565
    %v567 = vrot.slane %v73, %v566
    %v568 = vadd.f32 %v556, %v567
    %v569 = vadd.f32 %v561, %v567
    %v570 = vadd.f32 %v56, %v568
    %v571 = vadd.f32 %v57, %v569
    %v572 = vmul.f32 %v570, 0.5
    %v573 = vmul.f32 %v571, 0.5
    %574 = vst.msk [vmem:[#allocation8] sm:$0xff] %vm156, %v572
    %575 = vst.msk [vmem:[#allocation8 + $0x8] sm:$0xff] %vm156, %v573
    // Predicated region
    $region26: #{gresblock_pallas.1} parent=1 // pred_check
      _
    $region27: #{gresblock_pallas.1} parent=1 // pred_check_branch
      %577 = sbr.rel (0) target = $region29
    $region28: #{gresblock_pallas.1} parent=1 // pred_region
      %s579 = ssub.s32 256, 256
      %580 = vsyncadd [#allocation4], %s579
      %s581 = sshll.u32 [#allocation8], 4
      %s582 = int_to_ptr.vmem [resolvable:$true] %s581
      %587 = dma.vmem_to_hbm [thread:$0]  %s582, 256, %s3, [#allocation4], 128, 128, 8
    $region29: #{gresblock_pallas.1} parent=1 // pred_fallthru
      _
    // Predicated region
    $region30: #{gresblock_pallas.1} parent=1 // pred_check
      _
    $region31: #{gresblock_pallas.1} parent=1 // pred_check_branch
      %589 = sbr.rel (0) target = $region33
    $region32: #{gresblock_pallas.1} parent=1 // pred_region
      %590 = dma.done [#allocation4], 256
    $region33: #{gresblock_pallas.1} parent=1 // pred_fallthru
      _
    %591 = vsyncpa [#allocation3], 1
    %592 = vsyncpa [#allocation6], 1
    %593 = vsyncpa [#allocation4], 1

</llo_original>
